<compile_context>
chip_gen: v7x
topology: tpu7x:2x2x1
jax: 0.10.0
libtpu: 0.0.40
codegen_flags: <defaults>
</compile_context>

<pallas_src>
import functools
import math

import jax
import jax.numpy as jnp
from jax.experimental import pallas as pl
from jax.experimental.pallas import tpu as pltpu

EPS = 1e-07


def _contrast_loss_kernel(x_ref, o_ref, *, n_data, bsz, tile_b, mask_last):
    # Load in native dtype (bf16 stays bf16 over HBM), cast to f32 in VMEM.
    x = x_ref[...].astype(jnp.float32)                       # (tb, n_cols)
    tb, n_cols = x.shape
    m = n_cols - 1
    m_Pn = float(m) / float(n_data)
    c = m_Pn + EPS
    m_log_m_Pn = float(m) * math.log(m_Pn)                   # compile-time constant

    # One transcendental per element: the shared denominator terms log(x_j + c).
    log_denom = jnp.log(x + c)                                # (tb, n_cols)

    # Positive-column numerator straight from the ref: cheap (tb,1) strided vld,
    # independent of the full-block cast chain (gives the scheduler slack).
    pos_log = jnp.log(x_ref[:, 0:1].astype(jnp.float32))      # (tb, 1)

    # Lane (XLU) reduce once per block, then per-row VPU adds.
    row_sum = jnp.sum(log_denom, axis=-1, keepdims=True)      # (tb, 1)
    per_row = pos_log - row_sum + m_log_m_Pn                  # (tb, 1)

    if mask_last:
        # Only when bsz % tile_b != 0: padded last-tile rows may hold garbage that
        # produced NaN/Inf above; a *select* (not multiplicative masking) discards it.
        row = (jax.lax.broadcasted_iota(jnp.int32, (tb, 1), 0)
               + pl.program_id(0) * tile_b)
        per_row = jnp.where(row < bsz, per_row, 0.0)

    # Per-tile partial sum; final reduce / negate / scale happen in the wrapper.
    o_ref[...] = jnp.sum(per_row, axis=0, keepdims=True).reshape(1, 1, 1)


def _pick_tile_b(bsz, n_cols, target_f32_bytes=8 << 20):
    """Row tile sized so the f32-equivalent block is ~8 MiB (amortizes the
    ~0.35 us per-grid-step overhead while fitting v7x's 64 MiB VMEM after
    double-buffering + in-kernel f32 temporaries)."""
    rows = target_f32_bytes // max(1, n_cols * 4)
    rows = (rows // 32) * 32          # multiple of 32: safe sublane count for f32/bf16
    rows = max(rows, 32)
    rows = min(rows, 2048)
    if rows >= bsz:
        return bsz                    # single block == full dim (always legal)
    return int(rows)


def contrast_loss(x, n_data, *, tile_b=None, force_kernel=False):
    """x: (bsz, m+1) or (bsz, m+1, 1) scores, column 0 = positive. Returns scalar loss."""
    if x.ndim == 3:
        x = jnp.squeeze(x, axis=-1)
    bsz, n_cols = x.shape

    # Tiny configs (e.g. the default 17-column setup) are dominated by fixed
    # pallas_call overhead and lane padding -> use the fused XLA path instead.
    if not force_kernel and (n_cols < 128 or bsz * n_cols < 4096):
        return contrast_loss_ref(x, n_data)

    if tile_b is None:
        tile_b = _pick_tile_b(bsz, n_cols)
    n_tiles = pl.cdiv(bsz, tile_b)

    # Explicit scoped-VMEM budget: 2x double-buffered native input block plus a
    # conservative 4x f32-block allowance for in-kernel temporaries, capped below
    # v7x's 64 MiB physical VMEM (v5e/v6e have 128 MiB physical, so it's safe there).
    block_native = tile_b * n_cols * x.dtype.itemsize
    block_f32 = tile_b * n_cols * 4
    vmem_limit = int(2 * block_native + 4 * block_f32 + (2 << 20))
    vmem_limit = max(32 << 20, min(vmem_limit, 56 << 20))

    kernel = functools.partial(
        _contrast_loss_kernel,
        n_data=n_data, bsz=bsz, tile_b=tile_b,
        mask_last=(bsz % tile_b != 0))

    partials = pl.pallas_call(
        kernel,
        out_shape=jax.ShapeDtypeStruct((n_tiles, 1, 1), jnp.float32),
        grid_spec=pltpu.PrefetchScalarGridSpec(
            num_scalar_prefetch=0,
            grid=(n_tiles,),
            in_specs=[pl.BlockSpec((tile_b, n_cols), lambda i: (i, 0))],
            out_specs=pl.BlockSpec((1, 1, 1), lambda i: (i, 0, 0)),
        ),
        compiler_params=pltpu.CompilerParams(
            # Each grid step writes its own output block -> truly parallel,
            # so both TensorCores are used on v7x.
            dimension_semantics=("parallel",),
            vmem_limit_bytes=vmem_limit,
        ),
        cost_estimate=pl.CostEstimate(
            flops=int(3 * bsz * n_cols),
            transcendentals=int(bsz * (n_cols + 1)),
            bytes_accessed=int(bsz * n_cols * x.dtype.itemsize + n_tiles * 4),
        ),
    )(x)  # no pre-cast: native dtype over HBM, cast happens in-kernel

    # Final reduce (f32 tree over n_tiles partials), negate, scale — in JAX.
    return -jnp.sum(partials) / float(bsz)


def contrast_loss_ref(x, n_data):
    """Pure-JAX reference mirroring the PyTorch forward exactly."""
    if x.ndim == 3:
        x = jnp.squeeze(x, axis=-1)
    x = x.astype(jnp.float32)
    bsz = x.shape[0]
    m = x.shape[1] - 1
    Pn = 1.0 / float(n_data)
    c = m * Pn + EPS
    P_pos = x[:, 0]
    log_D1 = jnp.log(P_pos / (P_pos + c))
    P_neg = x[:, 1:]
    log_D0 = jnp.log((m * Pn) / (P_neg + c))
    return -(jnp.sum(log_D1) + jnp.sum(log_D0)) / bsz


if __name__ == "__main__":
    key = jax.random.PRNGKey(0)
    n_data = 4096
    k1, k2, k3, k4 = jax.random.split(key, 4)

    # 1. Module-default shape: bsz=8, 16 negatives + 1 positive, trailing dim 1.
    #    force_kernel=True so the Pallas path is exercised even at this tiny size.
    x1 = jax.random.uniform(k1, (8, 17, 1), jnp.float32, 0.05, 0.95)
    out1 = jax.block_until_ready(contrast_loss(x1, n_data, force_kernel=True))
    ref1 = contrast_loss_ref(x1, n_data)
    assert jnp.allclose(out1, ref1, rtol=1e-4, atol=1e-4), (out1, ref1)

    # 2. Multi-tile grid with a partial last tile (100 % 16 != 0) -> masked path.
    x2 = jax.random.uniform(k2, (100, 65), jnp.float32, 0.05, 0.95)
    out2 = jax.block_until_ready(contrast_loss(x2, n_data, tile_b=16, force_kernel=True))
    ref2 = contrast_loss_ref(x2, n_data)
    assert jnp.allclose(out2, ref2, rtol=1e-4, atol=1e-4), (out2, ref2)

    # 3. bf16 input travels over HBM as bf16; the in-kernel f32 cast matches the ref.
    x3 = jax.random.uniform(k3, (64, 160), jnp.float32, 0.05, 0.95).astype(jnp.bfloat16)
    out3 = jax.block_until_ready(contrast_loss(x3, n_data, tile_b=32, force_kernel=True))
    ref3 = contrast_loss_ref(x3, n_data)
    assert jnp.allclose(out3, ref3, rtol=1e-3, atol=1e-3), (out3, ref3)

    # 4. Default dispatch: wide rows pick the kernel path automatically.
    x4 = jax.random.uniform(k4, (64, 256), jnp.float32, 0.05, 0.95)
    out4 = jax.block_until_ready(contrast_loss(x4, n_data))
    ref4 = contrast_loss_ref(x4, n_data)
    assert jnp.allclose(out4, ref4, rtol=1e-4, atol=1e-4), (out4, ref4)

    print("KERNEL_OK")
</pallas_src>

<mosaic_0001>
module attributes {stable_mosaic.version = 11 : i64} {
  func.func @_contrast_loss_kernel(%arg0: i32, %arg1: memref<8x17xf32, #tpu.memory_space<vmem>>, %arg2: memref<1x1x1xf32, #tpu.memory_space<vmem>>) attributes {dimension_semantics = [#tpu.dimension_semantics<parallel>], iteration_bounds = array<i64: 1>, scalar_prefetch = 0 : i64, scratch_operands = 0 : i64, tpu.core_type = #tpu.core_type<tc>, window_params = [{transform_indices = @transform_0, window_bounds = array<i64: 8, 17>}, {transform_indices = @transform_1, window_bounds = array<i64: 1, 1, 1>}]} {
    %c0 = arith.constant 0 : index
    %c0_0 = arith.constant 0 : index
    %0 = vector.load %arg1[%c0, %c0_0] : memref<8x17xf32, #tpu.memory_space<vmem>>, vector<8x17xf32>
    %cst = arith.constant 3.906350e-03 : f32
    %1 = vector.broadcast %cst : f32 to vector<8x17xf32>
    %2 = arith.addf %0, %1 : vector<8x17xf32>
    %3 = math.log %2 : vector<8x17xf32>
    %c0_1 = arith.constant 0 : index
    %c0_2 = arith.constant 0 : index
    %4 = vector.load %arg1[%c0_1, %c0_2] : memref<8x17xf32, #tpu.memory_space<vmem>>, vector<8x1xf32>
    %5 = math.log %4 : vector<8x1xf32>
    %cst_3 = arith.constant dense<0.000000e+00> : vector<8xf32>
    %6 = vector.multi_reduction <add>, %3, %cst_3 [1] : vector<8x17xf32> to vector<8xf32>
    %7 = vector.shape_cast %6 : vector<8xf32> to vector<8x1xf32>
    %8 = arith.subf %5, %7 : vector<8x1xf32>
    %cst_4 = arith.constant -88.7228394 : f32
    %9 = vector.broadcast %cst_4 : f32 to vector<8x1xf32>
    %10 = arith.addf %8, %9 : vector<8x1xf32>
    %cst_5 = arith.constant dense<0.000000e+00> : vector<1xf32>
    %11 = vector.multi_reduction <add>, %10, %cst_5 [0] : vector<8x1xf32> to vector<1xf32>
    %12 = vector.shape_cast %11 : vector<1xf32> to vector<1x1xf32>
    %13 = vector.shape_cast %12 : vector<1x1xf32> to vector<1x1x1xf32>
    %c0_6 = arith.constant 0 : index
    %c0_7 = arith.constant 0 : index
    %c0_8 = arith.constant 0 : index
    %14 = vector.load %arg2[%c0_6, %c0_7, %c0_8] : memref<1x1x1xf32, #tpu.memory_space<vmem>>, vector<1x1x1xf32>
    tpu.vector_store %arg2[%c0_6, %c0_7, %c0_8], %13 {strides = array<i32>} : memref<1x1x1xf32, #tpu.memory_space<vmem>>, vector<1x1x1xf32>,
    return
  }
  func.func @transform_0(%arg0: i32) -> (i32, i32) {
    %c0_i32 = arith.constant 0 : i32
    %c0_i32_0 = arith.constant 0 : i32
    return %arg0, %c0_i32 : i32, i32
  }
  func.func @transform_1(%arg0: i32) -> (i32, i32, i32) {
    %c0_i32 = arith.constant 0 : i32
    %c0_i32_0 = arith.constant 0 : i32
    %c0_i32_1 = arith.constant 0 : i32
    return %arg0, %c0_i32, %c0_i32_0 : i32, i32, i32
  }
}

</mosaic_0001>

<llo_original>
// kernel: tpu_custom_call.1
$region0: #{tpu_custom_call.1}
  #allocation0 [shape = 'u32[]', space=smem, size = 0x4, offset = 0x4, fixed_abs, tag = 'smem constant byte address 0x4 - core index']
  #allocation1 [shape = 'u32[144,128]{1,0:T(1,128)}', space=vmem, size = 0x12000, scoped, tag = 'internal scratch']
  %s0 = inlined_call_operand.hbm [shape: f32[8,17], index: 0, kind: input, shape index: {}]
  %s1 = inlined_call_operand.hbm [shape: f32[1,1,1], index: 1, kind: output, shape index: {}]
  %s2 = sld [smem:[#allocation0]]
  $region18: #{tpu_custom_call.1} parent=0
    _
  %s4 = ssub.s32 1, %s2
  %s5 = scalar_select 0, %s4, %s2
  $region1: #{tpu_custom_call.1} parent=0
    #allocation2 [shape = 'u8[4096]{0}', space=vmem, size = 0x1000, scoped, tag = 'input window, operand 0, single buffered']
    #allocation3 [shape = 's32[1]{0}', space=sflag, size = 0x4, scoped, tag = 'scoped memory for tpu_custom_call.1']
    #allocation4 [shape = 's32[1]{0}', space=sflag, size = 0x4, scoped, tag = 'scoped memory for tpu_custom_call.1']
    #allocation5 [shape = 'u8[512]{0}', space=vmem, size = 0x400, scoped, tag = 'output window, operand 0, single buffered']
    %6 = vsyncpa [#allocation3], 0
    %7 = vsyncpa [#allocation4], 0
    // Predicated region
    $region2: #{tpu_custom_call.1} parent=1 // pred_check
      _
    $region3: #{tpu_custom_call.1} parent=1 // pred_check_branch
      %9 = sbr.rel (0) target = $region5
    $region4: #{tpu_custom_call.1} parent=1 // pred_region
      %s11 = ssub.s32 128, 128
      %12 = vsyncadd [#allocation3], %s11
      %s14 = sshll.u32 [#allocation2], 4
      %s15 = int_to_ptr.vmem [resolvable:$true] %s14
      %17 = dma.hbm_to_vmem [thread:$0]  %s0, 128, %s15, [#allocation3]
    $region5: #{tpu_custom_call.1} parent=1 // pred_fallthru
      _
    // Predicated region
    $region6: #{tpu_custom_call.1} parent=1 // pred_check
      _
    $region7: #{tpu_custom_call.1} parent=1 // pred_check_branch
      %19 = sbr.rel (0) target = $region9
    $region8: #{tpu_custom_call.1} parent=1 // pred_region
      %20 = dma.done [#allocation3], 128
    $region9: #{tpu_custom_call.1} parent=1 // pred_fallthru
      _
    %v21 = vld [vmem:[#allocation2] sm:$0xff]
    %v22 = vadd.f32 %v21, 0.00390635
    %v23 = vlog2.pop %v22
    %v24 = vmul.f32 %v23, 0.6931472
    %v25 = vlog2.pop %v21
    %v26 = vmul.f32 %v25, 0.6931472
    %vm27 = vcmask 138240
    %v28 = vsel %vm27, %v24, 0.0
    %29 = vadd.xlane.f32.xlu0 %v28
    %v30 = vpop.xlane.xlu0 %29
    %v31 = vsub.f32 %v26, %v30
    %v32 = vadd.f32 %v31, -88.72284
    %vm33 = vcmask 7168
    %v34 = vsel %vm33, %v32, 0.0
    %v35 = vrot.slane %v34, 4
    %v36 = vadd.f32 %v34, %v35
    %v37 = vrot.slane %v36, 2
    %v38 = vadd.f32 %v36, %v37
    %v39 = vrot.slane %v38, 1
    %v40 = vadd.f32 %v38, %v39
    %vm41 = vcmask 0
    %42 = vst.msk [vmem:[#allocation5] sm:$0x1] %vm41, %v40
    // Predicated region
    $region10: #{tpu_custom_call.1} parent=1 // pred_check
      _
    $region11: #{tpu_custom_call.1} parent=1 // pred_check_branch
      %44 = sbr.rel (0) target = $region13
    $region12: #{tpu_custom_call.1} parent=1 // pred_region
      %s46 = ssub.s32 16, 16
      %47 = vsyncadd [#allocation4], %s46
      %s49 = sshll.u32 [#allocation5], 4
      %s50 = int_to_ptr.vmem [resolvable:$true] %s49
      %52 = dma.vmem_to_hbm [thread:$0]  %s50, 16, %s1, [#allocation4]
    $region13: #{tpu_custom_call.1} parent=1 // pred_fallthru
      _
    // Predicated region
    $region14: #{tpu_custom_call.1} parent=1 // pred_check
      _
    $region15: #{tpu_custom_call.1} parent=1 // pred_check_branch
      %54 = sbr.rel (0) target = $region17
    $region16: #{tpu_custom_call.1} parent=1 // pred_region
      %55 = dma.done [#allocation4], 16
    $region17: #{tpu_custom_call.1} parent=1 // pred_fallthru
      _
    %56 = vsyncpa [#allocation3], 1
    %57 = vsyncpa [#allocation4], 1

</llo_original>
